<compile_context>
chip_gen: v6e
topology: v6e:2x2x1
jax: 0.10.0
libtpu: 0.0.40
codegen_flags: <defaults>
</compile_context>

<pallas_src>
import numpy as np
import jax
import jax.numpy as jnp
from jax.experimental import pallas as pl
from jax.experimental.pallas import tpu as pltpu


def _mlp_kernel(xT_ref, w1_ref, b1_ref, w2_ref, b2_ref, w3_ref, b3_ref, oT_ref):
    """One batch tile. xT_ref: [obs_dim, TB] -> oT_ref: [act_dim, TB]."""
    cdt = w1_ref.dtype  # matmul-input dtype (f32 or bf16); accumulation stays f32

    xT = xT_ref[...]                                                      # [obs, TB]
    h1 = jnp.dot(w1_ref[...], xT, preferred_element_type=jnp.float32)     # [H, TB]
    h1 = jnp.maximum(h1 + b1_ref[...], 0.0)                               # f32 epilogue

    h2 = jnp.dot(w2_ref[...], h1.astype(cdt), preferred_element_type=jnp.float32)
    h2 = jnp.maximum(h2 + b2_ref[...], 0.0)

    o = jnp.dot(w3_ref[...], h2.astype(cdt), preferred_element_type=jnp.float32)
    oT_ref[...] = (o + b3_ref[...]).astype(oT_ref.dtype)                  # [act, TB]


def bc_policy_forward_t(xT, params, *, block_b=1024, compute_dtype=jnp.float32):
    """Batch-on-lanes entry point.

    xT: [obs_dim, B] (batch on the lane axis). Returns [act_dim, B] float32.
    params: PyTorch-native layout: w_i [out, in], b_i [out].
    """
    obs_dim, B = xT.shape
    w1, b1 = params["w1"], params["b1"]
    w2, b2 = params["w2"], params["b2"]
    w3, b3 = params["w3"], params["b3"]
    hid = w1.shape[0]
    act_dim = w3.shape[0]

    # Batch (lane-axis) tile. Must be a multiple of 128 unless it is the full
    # extent; partial final tiles are masked by Pallas.
    if B <= block_b:
        tb = B
    else:
        tb = block_b
        assert tb % 128 == 0, "block_b must be a multiple of 128"
    grid = (pl.cdiv(B, tb),)

    cdt = np.dtype(compute_dtype)
    xT_c = xT.astype(cdt)
    w1c, w2c, w3c = w1.astype(cdt), w2.astype(cdt), w3.astype(cdt)
    # Biases stay f32 ([out, 1]) so the bias-add + ReLU epilogue is pure f32
    # VPU work (avoids bf16 elementwise casts on v5e).
    b1c = b1.reshape(hid, 1).astype(jnp.float32)
    b2c = b2.reshape(hid, 1).astype(jnp.float32)
    b3c = b3.reshape(act_dim, 1).astype(jnp.float32)

    def resident(shape):
        # Constant block index -> stays resident in VMEM across grid steps.
        return pl.BlockSpec(shape, lambda i: (0, 0))

    weight_bytes = (w1c.size + w2c.size + w3c.size) * cdt.itemsize \
                 + (b1c.size + b2c.size + b3c.size) * 4
    cost = pl.CostEstimate(
        flops=2 * B * (obs_dim * hid + hid * hid + hid * act_dim),
        transcendentals=0,
        bytes_accessed=B * obs_dim * cdt.itemsize + B * act_dim * 4 + weight_bytes,
    )

    return pl.pallas_call(
        _mlp_kernel,
        out_shape=jax.ShapeDtypeStruct((act_dim, B), jnp.float32),
        grid=grid,
        in_specs=[
            pl.BlockSpec((obs_dim, tb), lambda i: (0, i)),   # x tile (streamed, pipelined)
            resident((hid, obs_dim)),                        # W1
            resident((hid, 1)),                              # b1
            resident((hid, hid)),                            # W2
            resident((hid, 1)),                              # b2
            resident((act_dim, hid)),                        # W3
            resident((act_dim, 1)),                          # b3
        ],
        out_specs=pl.BlockSpec((act_dim, tb), lambda i: (0, i)),
        compiler_params=pltpu.CompilerParams(
            dimension_semantics=("parallel",),               # megacore on v7x
            vmem_limit_bytes=32 * 1024 * 1024,               # explicit, v7x-safe
        ),
        cost_estimate=cost,
    )(xT_c, w1c, b1c, w2c, b2c, w3c, b3c)


def bc_policy_forward(x, params, *, block_b=1024, compute_dtype=jnp.float32):
    """PyTorch-style interface: x [B, obs_dim] float -> [B, act_dim] float32."""
    # TODO(synk): producers that can emit x already transposed ([obs_dim, B])
    # should call bc_policy_forward_t directly to avoid these two layout
    # transposes around the kernel.
    oT = bc_policy_forward_t(x.T, params, block_b=block_b,
                             compute_dtype=compute_dtype)
    return oT.T


def init_params(key, obs_dim=12, act_dim=6, hidden_size=64):
    """PyTorch-native storage: W [out, in], b [out]; uniform(-1/sqrt(fan_in), +)."""
    ks = jax.random.split(key, 6)

    def lin(kw, kb, fan_in, fan_out):
        bound = 1.0 / jnp.sqrt(float(fan_in))
        w = jax.random.uniform(kw, (fan_out, fan_in), jnp.float32, -bound, bound)
        b = jax.random.uniform(kb, (fan_out,), jnp.float32, -bound, bound)
        return w, b

    w1, b1 = lin(ks[0], ks[1], obs_dim, hidden_size)
    w2, b2 = lin(ks[2], ks[3], hidden_size, hidden_size)
    w3, b3 = lin(ks[4], ks[5], hidden_size, act_dim)
    return {"w1": w1, "b1": b1, "w2": w2, "b2": b2, "w3": w3, "b3": b3}


def _reference_forward(x, p):
    h1 = jnp.maximum(x @ p["w1"].T + p["b1"], 0.0)
    h2 = jnp.maximum(h1 @ p["w2"].T + p["b2"], 0.0)
    return h2 @ p["w3"].T + p["b3"]


if __name__ == "__main__":
    key = jax.random.PRNGKey(0)
    k_x, k_x_big, k_p = jax.random.split(key, 3)

    OBS, ACT, HID = 12, 6, 64
    params = init_params(k_p, obs_dim=OBS, act_dim=ACT, hidden_size=HID)

    # --- Small batch (module-scale) check, f32 -------------------------------
    B = 8
    x = jax.random.normal(k_x, (B, OBS), jnp.float32)
    out = jax.block_until_ready(bc_policy_forward(x, params))
    ref = _reference_forward(x, params)
    assert out.shape == (B, ACT), out.shape
    assert jnp.allclose(out, ref, atol=1e-5, rtol=1e-5), "small-batch f32 mismatch"

    # --- Larger batch exercising the batch grid (grid=(4,)), f32 -------------
    B_big = 1024
    x_big = jax.random.normal(k_x_big, (B_big, OBS), jnp.float32)
    out_big = jax.block_until_ready(
        bc_policy_forward(x_big, params, block_b=256))
    ref_big = _reference_forward(x_big, params)
    assert out_big.shape == (B_big, ACT), out_big.shape
    assert jnp.allclose(out_big, ref_big, atol=1e-4, rtol=1e-4), "tiled f32 mismatch"

    # --- bf16 input/weight path (f32 accumulation + f32 epilogue) ------------
    out_bf16 = jax.block_until_ready(
        bc_policy_forward(x_big, params, block_b=256, compute_dtype=jnp.bfloat16))
    assert out_bf16.shape == (B_big, ACT)
    assert bool(jnp.all(jnp.isfinite(out_bf16)))
    assert float(jnp.max(jnp.abs(out_bf16 - ref_big))) < 0.1, "bf16 path too far off"

    print("KERNEL_OK")
</pallas_src>

<mosaic_0001>
module attributes {stable_mosaic.version = 11 : i64} {
  func.func @_mlp_kernel(%arg0: i32, %arg1: memref<12x8xf32, #tpu.memory_space<vmem>>, %arg2: memref<64x12xf32, #tpu.memory_space<vmem>>, %arg3: memref<64x1xf32, #tpu.memory_space<vmem>>, %arg4: memref<64x64xf32, #tpu.memory_space<vmem>>, %arg5: memref<64x1xf32, #tpu.memory_space<vmem>>, %arg6: memref<6x64xf32, #tpu.memory_space<vmem>>, %arg7: memref<6x1xf32, #tpu.memory_space<vmem>>, %arg8: memref<6x8xf32, #tpu.memory_space<vmem>>) attributes {dimension_semantics = [#tpu.dimension_semantics<parallel>], iteration_bounds = array<i64: 1>, scalar_prefetch = 0 : i64, scratch_operands = 0 : i64, tpu.core_type = #tpu.core_type<tc>, window_params = [{transform_indices = @transform_0, window_bounds = array<i64: 12, 8>}, {pipeline_mode = #tpu.pipeline_mode<synchronous>, transform_indices = @transform_1, window_bounds = array<i64: 64, 12>}, {pipeline_mode = #tpu.pipeline_mode<synchronous>, transform_indices = @transform_2, window_bounds = array<i64: 64, 1>}, {pipeline_mode = #tpu.pipeline_mode<synchronous>, transform_indices = @transform_3, window_bounds = array<i64: 64, 64>}, {pipeline_mode = #tpu.pipeline_mode<synchronous>, transform_indices = @transform_4, window_bounds = array<i64: 64, 1>}, {pipeline_mode = #tpu.pipeline_mode<synchronous>, transform_indices = @transform_5, window_bounds = array<i64: 6, 64>}, {pipeline_mode = #tpu.pipeline_mode<synchronous>, transform_indices = @transform_6, window_bounds = array<i64: 6, 1>}, {transform_indices = @transform_7, window_bounds = array<i64: 6, 8>}]} {
    %c0 = arith.constant 0 : index
    %c0_0 = arith.constant 0 : index
    %0 = vector.load %arg1[%c0, %c0_0] : memref<12x8xf32, #tpu.memory_space<vmem>>, vector<12x8xf32>
    %c0_1 = arith.constant 0 : index
    %c0_2 = arith.constant 0 : index
    %1 = vector.load %arg2[%c0_1, %c0_2] : memref<64x12xf32, #tpu.memory_space<vmem>>, vector<64x12xf32>
    %cst = arith.constant dense<0.000000e+00> : vector<64x8xf32>
    %2 = tpu.matmul %1, %0, %cst {dimension_numbers = #tpu.dot_dimension_numbers<[1], [0], [0], [1], [0, 0, 1, 1], [], []>} : vector<64x12xf32>, vector<12x8xf32>, vector<64x8xf32> -> vector<64x8xf32>
    %c0_3 = arith.constant 0 : index
    %c0_4 = arith.constant 0 : index
    %3 = vector.load %arg3[%c0_3, %c0_4] : memref<64x1xf32, #tpu.memory_space<vmem>>, vector<64x1xf32>
    %4 = vector.broadcast %3 : vector<64x1xf32> to vector<64x8xf32>
    %5 = arith.addf %2, %4 : vector<64x8xf32>
    %cst_5 = arith.constant 0.000000e+00 : f32
    %6 = vector.broadcast %cst_5 : f32 to vector<64x8xf32>
    %7 = arith.maximumf %5, %6 : vector<64x8xf32>
    %c0_6 = arith.constant 0 : index
    %c0_7 = arith.constant 0 : index
    %8 = vector.load %arg4[%c0_6, %c0_7] : memref<64x64xf32, #tpu.memory_space<vmem>>, vector<64x64xf32>
    %cst_8 = arith.constant dense<0.000000e+00> : vector<64x8xf32>
    %9 = tpu.matmul %8, %7, %cst_8 {dimension_numbers = #tpu.dot_dimension_numbers<[1], [0], [0], [1], [0, 0, 1, 1], [], []>} : vector<64x64xf32>, vector<64x8xf32>, vector<64x8xf32> -> vector<64x8xf32>
    %c0_9 = arith.constant 0 : index
    %c0_10 = arith.constant 0 : index
    %10 = vector.load %arg5[%c0_9, %c0_10] : memref<64x1xf32, #tpu.memory_space<vmem>>, vector<64x1xf32>
    %11 = vector.broadcast %10 : vector<64x1xf32> to vector<64x8xf32>
    %12 = arith.addf %9, %11 : vector<64x8xf32>
    %cst_11 = arith.constant 0.000000e+00 : f32
    %13 = vector.broadcast %cst_11 : f32 to vector<64x8xf32>
    %14 = arith.maximumf %12, %13 : vector<64x8xf32>
    %c0_12 = arith.constant 0 : index
    %c0_13 = arith.constant 0 : index
    %15 = vector.load %arg6[%c0_12, %c0_13] : memref<6x64xf32, #tpu.memory_space<vmem>>, vector<6x64xf32>
    %cst_14 = arith.constant dense<0.000000e+00> : vector<6x8xf32>
    %16 = tpu.matmul %15, %14, %cst_14 {dimension_numbers = #tpu.dot_dimension_numbers<[1], [0], [0], [1], [0, 0, 1, 1], [], []>} : vector<6x64xf32>, vector<64x8xf32>, vector<6x8xf32> -> vector<6x8xf32>
    %c0_15 = arith.constant 0 : index
    %c0_16 = arith.constant 0 : index
    %17 = vector.load %arg7[%c0_15, %c0_16] : memref<6x1xf32, #tpu.memory_space<vmem>>, vector<6x1xf32>
    %18 = vector.broadcast %17 : vector<6x1xf32> to vector<6x8xf32>
    %19 = arith.addf %16, %18 : vector<6x8xf32>
    %c0_17 = arith.constant 0 : index
    %c0_18 = arith.constant 0 : index
    %20 = vector.load %arg8[%c0_17, %c0_18] : memref<6x8xf32, #tpu.memory_space<vmem>>, vector<6x8xf32>
    tpu.vector_store %arg8[%c0_17, %c0_18], %19 {strides = array<i32>} : memref<6x8xf32, #tpu.memory_space<vmem>>, vector<6x8xf32>,
    return
  }
  func.func @transform_0(%arg0: i32) -> (i32, i32) {
    %c0_i32 = arith.constant 0 : i32
    %c0_i32_0 = arith.constant 0 : i32
    return %c0_i32, %arg0 : i32, i32
  }
  func.func @transform_1(%arg0: i32) -> (i32, i32) {
    %c0_i32 = arith.constant 0 : i32
    %c0_i32_0 = arith.constant 0 : i32
    %c0_i32_1 = arith.constant 0 : i32
    return %c0_i32, %c0_i32_0 : i32, i32
  }
  func.func @transform_2(%arg0: i32) -> (i32, i32) {
    %c0_i32 = arith.constant 0 : i32
    %c0_i32_0 = arith.constant 0 : i32
    %c0_i32_1 = arith.constant 0 : i32
    return %c0_i32, %c0_i32_0 : i32, i32
  }
  func.func @transform_3(%arg0: i32) -> (i32, i32) {
    %c0_i32 = arith.constant 0 : i32
    %c0_i32_0 = arith.constant 0 : i32
    %c0_i32_1 = arith.constant 0 : i32
    return %c0_i32, %c0_i32_0 : i32, i32
  }
  func.func @transform_4(%arg0: i32) -> (i32, i32) {
    %c0_i32 = arith.constant 0 : i32
    %c0_i32_0 = arith.constant 0 : i32
    %c0_i32_1 = arith.constant 0 : i32
    return %c0_i32, %c0_i32_0 : i32, i32
  }
  func.func @transform_5(%arg0: i32) -> (i32, i32) {
    %c0_i32 = arith.constant 0 : i32
    %c0_i32_0 = arith.constant 0 : i32
    %c0_i32_1 = arith.constant 0 : i32
    return %c0_i32, %c0_i32_0 : i32, i32
  }
  func.func @transform_6(%arg0: i32) -> (i32, i32) {
    %c0_i32 = arith.constant 0 : i32
    %c0_i32_0 = arith.constant 0 : i32
    %c0_i32_1 = arith.constant 0 : i32
    return %c0_i32, %c0_i32_0 : i32, i32
  }
  func.func @transform_7(%arg0: i32) -> (i32, i32) {
    %c0_i32 = arith.constant 0 : i32
    %c0_i32_0 = arith.constant 0 : i32
    return %c0_i32, %arg0 : i32, i32
  }
}

</mosaic_0001>

<llo_original>
// kernel: tpu_custom_call.1
$region0: #{tpu_custom_call.1}
  #allocation0 [shape = 'u32[]', space=smem, size = 0x4, offset = 0x4, fixed_abs, tag = 'smem constant byte address 0x4 - core index']
  #allocation1 [shape = 'u32[144,128]{1,0:T(1,128)}', space=vmem, size = 0x12000, scoped, tag = 'internal scratch']
  %s0 = inlined_call_operand.vmem [shape: f32[12,8], index: 0, kind: input, shape index: {}]
  %s1 = inlined_call_operand.vmem [shape: f32[64,12], index: 1, kind: input, shape index: {}]
  %s2 = inlined_call_operand.vmem [shape: f32[64,1], index: 2, kind: input, shape index: {}]
  %s3 = inlined_call_operand.vmem [shape: f32[64,64], index: 3, kind: input, shape index: {}]
  %s4 = inlined_call_operand.vmem [shape: f32[64,1], index: 4, kind: input, shape index: {}]
  %s5 = inlined_call_operand.vmem [shape: f32[6,64], index: 5, kind: input, shape index: {}]
  %s6 = inlined_call_operand.vmem [shape: f32[6,1], index: 6, kind: input, shape index: {}]
  %s7 = inlined_call_operand.hbm [shape: f32[6,8], index: 7, kind: output, shape index: {}]
  %s8 = sld [smem:[#allocation0]]
  $region38: #{tpu_custom_call.1} parent=0
    _
  %s10 = ssub.s32 1, %s8
  %s11 = scalar_select 0, %s10, %s8
  $region1: #{tpu_custom_call.1} parent=0
    #allocation2 [shape = 'u8[4096]{0}', space=vmem, size = 0x1000, scoped, tag = 'output window, operand 0, single buffered']
    #allocation3 [shape = 's32[1]{0}', space=sflag, size = 0x4, scoped, tag = 'scoped memory for tpu_custom_call.1']
    %12 = vsyncpa [#allocation3], 0
    // Predicated region
    $region2: #{tpu_custom_call.1} parent=1 // pred_check
      _
    $region3: #{tpu_custom_call.1} parent=1 // pred_check_branch
      %14 = sbr.rel (0) target = $region5
    $region4: #{tpu_custom_call.1} parent=1 // pred_region
      _
    $region5: #{tpu_custom_call.1} parent=1 // pred_fallthru
      _
    // Predicated region
    $region6: #{tpu_custom_call.1} parent=1 // pred_check
      _
    $region7: #{tpu_custom_call.1} parent=1 // pred_check_branch
      %16 = sbr.rel (0) target = $region9
    $region8: #{tpu_custom_call.1} parent=1 // pred_region
      _
    $region9: #{tpu_custom_call.1} parent=1 // pred_fallthru
      _
    // Predicated region
    $region10: #{tpu_custom_call.1} parent=1 // pred_check
      _
    $region11: #{tpu_custom_call.1} parent=1 // pred_check_branch
      %18 = sbr.rel (0) target = $region13
    $region12: #{tpu_custom_call.1} parent=1 // pred_region
      _
    $region13: #{tpu_custom_call.1} parent=1 // pred_fallthru
      _
    // Predicated region
    $region14: #{tpu_custom_call.1} parent=1 // pred_check
      _
    $region15: #{tpu_custom_call.1} parent=1 // pred_check_branch
      %20 = sbr.rel (0) target = $region17
    $region16: #{tpu_custom_call.1} parent=1 // pred_region
      _
    $region17: #{tpu_custom_call.1} parent=1 // pred_fallthru
      _
    // Predicated region
    $region18: #{tpu_custom_call.1} parent=1 // pred_check
      _
    $region19: #{tpu_custom_call.1} parent=1 // pred_check_branch
      %22 = sbr.rel (0) target = $region21
    $region20: #{tpu_custom_call.1} parent=1 // pred_region
      _
    $region21: #{tpu_custom_call.1} parent=1 // pred_fallthru
      _
    // Predicated region
    $region22: #{tpu_custom_call.1} parent=1 // pred_check
      _
    $region23: #{tpu_custom_call.1} parent=1 // pred_check_branch
      %24 = sbr.rel (0) target = $region25
    $region24: #{tpu_custom_call.1} parent=1 // pred_region
      _
    $region25: #{tpu_custom_call.1} parent=1 // pred_fallthru
      _
    // Predicated region
    $region26: #{tpu_custom_call.1} parent=1 // pred_check
      _
    $region27: #{tpu_custom_call.1} parent=1 // pred_check_branch
      %26 = sbr.rel (0) target = $region29
    $region28: #{tpu_custom_call.1} parent=1 // pred_region
      _
    $region29: #{tpu_custom_call.1} parent=1 // pred_fallthru
      _
    %v27 = vld [vmem:[%s0] sm:$0xff]
    %v28 = vld [vmem:[%s0 + $0x8] sm:$0xf]
    %v29 = vld [vmem:[%s1] sm:$0xff]
    %v30 = vld [vmem:[%s1 + $0x8] sm:$0xff]
    %v31 = vld [vmem:[%s1 + $0x10] sm:$0xff]
    %v32 = vld [vmem:[%s1 + $0x18] sm:$0xff]
    %v33 = vld [vmem:[%s1 + $0x20] sm:$0xff]
    %v34 = vld [vmem:[%s1 + $0x28] sm:$0xff]
    %v35 = vld [vmem:[%s1 + $0x30] sm:$0xff]
    %v36 = vld [vmem:[%s1 + $0x38] sm:$0xff]
    %v37 = vld [vmem:[%s2] sm:$0xff]
    %v38 = vld [vmem:[%s2 + $0x8] sm:$0xff]
    %v39 = vld [vmem:[%s2 + $0x10] sm:$0xff]
    %v40 = vld [vmem:[%s2 + $0x18] sm:$0xff]
    %v41 = vld [vmem:[%s2 + $0x20] sm:$0xff]
    %v42 = vld [vmem:[%s2 + $0x28] sm:$0xff]
    %v43 = vld [vmem:[%s2 + $0x30] sm:$0xff]
    %v44 = vld [vmem:[%s2 + $0x38] sm:$0xff]
    %46 = vset.pattern.permute.xlu0 0
    %47 = vperm.xlu0 %46, %v37
    %v48 = vpop.permute.xlu0 %47
    %51 = vset.pattern.permute.xlu0 0
    %52 = vperm.xlu0 %51, %v38
    %v53 = vpop.permute.xlu0 %52
    %56 = vset.pattern.permute.xlu0 0
    %57 = vperm.xlu0 %56, %v39
    %v58 = vpop.permute.xlu0 %57
    %61 = vset.pattern.permute.xlu0 0
    %62 = vperm.xlu0 %61, %v40
    %v63 = vpop.permute.xlu0 %62
    %66 = vset.pattern.permute.xlu0 0
    %67 = vperm.xlu0 %66, %v41
    %v68 = vpop.permute.xlu0 %67
    %71 = vset.pattern.permute.xlu0 0
    %72 = vperm.xlu0 %71, %v42
    %v73 = vpop.permute.xlu0 %72
    %76 = vset.pattern.permute.xlu0 0
    %77 = vperm.xlu0 %76, %v43
    %v78 = vpop.permute.xlu0 %77
    %81 = vset.pattern.permute.xlu0 0
    %82 = vperm.xlu0 %81, %v44
    %v83 = vpop.permute.xlu0 %82
    %vm85 = vcmask 97280
    %v87 = vsel %vm85, %v29, 0
    %v90 = vsel %vm85, %v30, 0
    %v93 = vsel %vm85, %v31, 0
    %v96 = vsel %vm85, %v32, 0
    %v99 = vsel %vm85, %v33, 0
    %v102 = vsel %vm85, %v34, 0
    %v105 = vsel %vm85, %v35, 0
    %v108 = vsel %vm85, %v36, 0
    %vm110 = vcmask 1043456
    %v112 = vsel %vm110, %v28, 0
    %114 = vmatprep.subr.mxu0 0.0
    %115 = vmatpush1.msra.mxu0 0.0
    %116 = vmatprep.subr.mxu0 0.0
    %117 = vmatpush1.msra.mxu0 0.0
    %118 = vmatprep.subr.mxu0 0.0
    %119 = vmatpush1.msra.mxu0 0.0
    %120 = vmatprep.subr.mxu0 0.0
    %121 = vmatpush1.msra.mxu0 0.0
    %122 = vmatprep.subr.mxu0 0.0
    %123 = vmatpush1.msra.mxu0 0.0
    %124 = vmatprep.subr.mxu0 0.0
    %125 = vmatpush1.msra.mxu0 0.0
    %126 = vmatprep.subr.mxu0 0.0
    %127 = vmatpush1.msra.mxu0 0.0
    %128 = vmatprep.subr.mxu0 0.0
    %129 = vmatpush1.msra.mxu0 0.0
    %130 = vmatprep.subr.mxu0 0.0
    %131 = vmatpush1.msra.mxu0 0.0
    %132 = vmatprep.subr.mxu0 0.0
    %133 = vmatpush1.msra.mxu0 0.0
    %134 = vmatprep.subr.mxu0 0.0
    %135 = vmatpush1.msra.mxu0 0.0
    %136 = vmatprep.subr.mxu0 0.0
    %137 = vmatpush1.msra.mxu0 0.0
    %138 = vmatprep.subr.mxu0 0.0
    %139 = vmatpush1.msra.mxu0 0.0
    %140 = vmatprep.subr.mxu0 0.0
    %141 = vmatpush1.msra.mxu0 0.0
    %142 = vmatprep.subr.mxu0 0.0
    %143 = vmatpush1.msra.mxu0 %v112
    %144 = vmatprep.subr.mxu0 0.0
    %145 = vmatpush1.msra.mxu0 %v27
    %146 = vmatprep.subr.mxu0 0.0
    %147 = vmatpush2.msra.mxu0 0.0
    %148 = vmatprep.subr.mxu0 0.0
    %149 = vmatpush2.msra.mxu0 0.0
    %150 = vmatprep.subr.mxu0 0.0
    %151 = vmatpush2.msra.mxu0 0.0
    %152 = vmatprep.subr.mxu0 0.0
    %153 = vmatpush2.msra.mxu0 0.0
    %154 = vmatprep.subr.mxu0 0.0
    %155 = vmatpush2.msra.mxu0 0.0
    %156 = vmatprep.subr.mxu0 0.0
    %157 = vmatpush2.msra.mxu0 0.0
    %158 = vmatprep.subr.mxu0 0.0
    %159 = vmatpush2.msra.mxu0 0.0
    %160 = vmatprep.subr.mxu0 0.0
    %161 = vmatpush2.msra.mxu0 0.0
    %162 = vmatprep.subr.mxu0 0.0
    %163 = vmatpush2.msra.mxu0 0.0
    %164 = vmatprep.subr.mxu0 0.0
    %165 = vmatpush2.msra.mxu0 0.0
    %166 = vmatprep.subr.mxu0 0.0
    %167 = vmatpush2.msra.mxu0 0.0
    %168 = vmatprep.subr.mxu0 0.0
    %169 = vmatpush2.msra.mxu0 0.0
    %170 = vmatprep.subr.mxu0 0.0
    %171 = vmatpush2.msra.mxu0 0.0
    %172 = vmatprep.subr.mxu0 0.0
    %173 = vmatpush2.msra.mxu0 0.0
    %174 = vmatprep.subr.mxu0 0.0
    %175 = vmatpush2.msra.mxu0 0.0
    %176 = vmatprep.subr.mxu0 0.0
    %177 = vmatpush2.msra.mxu0 0.0
    %178 = vmatprep.mubr.f32.mxu0 0.0
    %179 = vmatmul.mubr.f32.gmra.mxu0 %v87
    %v180 = vpop.f32.mrf.mxu0
    %v181 = vadd.f32 %v48, %v180
    %v182 = vpop.f32.mrf.mxu0
    %183 = vmatprep.mubr.f32.mxu0 0.0
    %184 = vmatmul.mubr.f32.gmra.mxu0 %v90
    %v185 = vpop.f32.mrf.mxu0
    %v186 = vadd.f32 %v53, %v185
    %v187 = vpop.f32.mrf.mxu0
    %188 = vmatprep.mubr.f32.mxu0 0.0
    %189 = vmatmul.mubr.f32.gmra.mxu0 %v93
    %v190 = vpop.f32.mrf.mxu0
    %v191 = vadd.f32 %v58, %v190
    %v192 = vpop.f32.mrf.mxu0
    %193 = vmatprep.mubr.f32.mxu0 0.0
    %194 = vmatmul.mubr.f32.gmra.mxu0 %v96
    %v195 = vpop.f32.mrf.mxu0
    %v196 = vadd.f32 %v63, %v195
    %v197 = vpop.f32.mrf.mxu0
    %198 = vmatprep.mubr.f32.mxu0 0.0
    %199 = vmatmul.mubr.f32.gmra.mxu0 %v99
    %v200 = vpop.f32.mrf.mxu0
    %v201 = vadd.f32 %v68, %v200
    %v202 = vpop.f32.mrf.mxu0
    %203 = vmatprep.mubr.f32.mxu0 0.0
    %204 = vmatmul.mubr.f32.gmra.mxu0 %v102
    %v205 = vpop.f32.mrf.mxu0
    %v206 = vadd.f32 %v73, %v205
    %v207 = vpop.f32.mrf.mxu0
    %208 = vmatprep.mubr.f32.mxu0 0.0
    %209 = vmatmul.mubr.f32.gmra.mxu0 %v105
    %v210 = vpop.f32.mrf.mxu0
    %v211 = vadd.f32 %v78, %v210
    %v212 = vpop.f32.mrf.mxu0
    %213 = vmatprep.mubr.f32.mxu0 0.0
    %214 = vmatmul.mubr.f32.gmra.mxu0 %v108
    %v215 = vpop.f32.mrf.mxu0
    %v216 = vadd.f32 %v83, %v215
    %v217 = vpop.f32.mrf.mxu0
    %218 = vdwg.mxu0
    %v219 = vmax.f32 %v181, 0.0
    %v220 = vmax.f32 %v186, 0.0
    %v221 = vmax.f32 %v191, 0.0
    %v222 = vmax.f32 %v196, 0.0
    %v223 = vmax.f32 %v201, 0.0
    %v224 = vmax.f32 %v206, 0.0
    %v225 = vmax.f32 %v211, 0.0
    %v226 = vmax.f32 %v216, 0.0
    %v227 = vld [vmem:[%s3] sm:$0xff]
    %v228 = vld [vmem:[%s3 + $0x8] sm:$0xff]
    %v229 = vld [vmem:[%s3 + $0x10] sm:$0xff]
    %v230 = vld [vmem:[%s3 + $0x18] sm:$0xff]
    %v231 = vld [vmem:[%s3 + $0x20] sm:$0xff]
    %v232 = vld [vmem:[%s3 + $0x28] sm:$0xff]
    %v233 = vld [vmem:[%s3 + $0x30] sm:$0xff]
    %v234 = vld [vmem:[%s3 + $0x38] sm:$0xff]
    %v235 = vld [vmem:[%s4] sm:$0xff]
    %v236 = vld [vmem:[%s4 + $0x8] sm:$0xff]
    %v237 = vld [vmem:[%s4 + $0x10] sm:$0xff]
    %v238 = vld [vmem:[%s4 + $0x18] sm:$0xff]
    %v239 = vld [vmem:[%s4 + $0x20] sm:$0xff]
    %v240 = vld [vmem:[%s4 + $0x28] sm:$0xff]
    %v241 = vld [vmem:[%s4 + $0x30] sm:$0xff]
    %v242 = vld [vmem:[%s4 + $0x38] sm:$0xff]
    %244 = vset.pattern.permute.xlu0 0
    %245 = vperm.xlu0 %244, %v235
    %v246 = vpop.permute.xlu0 %245
    %249 = vset.pattern.permute.xlu0 0
    %250 = vperm.xlu0 %249, %v236
    %v251 = vpop.permute.xlu0 %250
    %254 = vset.pattern.permute.xlu0 0
    %255 = vperm.xlu0 %254, %v237
    %v256 = vpop.permute.xlu0 %255
    %259 = vset.pattern.permute.xlu0 0
    %260 = vperm.xlu0 %259, %v238
    %v261 = vpop.permute.xlu0 %260
    %264 = vset.pattern.permute.xlu0 0
    %265 = vperm.xlu0 %264, %v239
    %v266 = vpop.permute.xlu0 %265
    %269 = vset.pattern.permute.xlu0 0
    %270 = vperm.xlu0 %269, %v240
    %v271 = vpop.permute.xlu0 %270
    %274 = vset.pattern.permute.xlu0 0
    %275 = vperm.xlu0 %274, %v241
    %v276 = vpop.permute.xlu0 %275
    %279 = vset.pattern.permute.xlu0 0
    %280 = vperm.xlu0 %279, %v242
    %v281 = vpop.permute.xlu0 %280
    %vm283 = vcmask 523264
    %v285 = vsel %vm283, %v227, 0
    %v288 = vsel %vm283, %v228, 0
    %v291 = vsel %vm283, %v229, 0
    %v294 = vsel %vm283, %v230, 0
    %v297 = vsel %vm283, %v231, 0
    %v300 = vsel %vm283, %v232, 0
    %v303 = vsel %vm283, %v233, 0
    %v306 = vsel %vm283, %v234, 0
    %308 = vmatprep.subr.mxu0 0.0
    %309 = vmatpush1.msra.mxu0 0.0
    %310 = vmatprep.subr.mxu0 0.0
    %311 = vmatpush1.msra.mxu0 0.0
    %312 = vmatprep.subr.mxu0 0.0
    %313 = vmatpush1.msra.mxu0 0.0
    %314 = vmatprep.subr.mxu0 0.0
    %315 = vmatpush1.msra.mxu0 0.0
    %316 = vmatprep.subr.mxu0 0.0
    %317 = vmatpush1.msra.mxu0 0.0
    %318 = vmatprep.subr.mxu0 0.0
    %319 = vmatpush1.msra.mxu0 0.0
    %320 = vmatprep.subr.mxu0 0.0
    %321 = vmatpush1.msra.mxu0 0.0
    %322 = vmatprep.subr.mxu0 0.0
    %323 = vmatpush1.msra.mxu0 0.0
    %324 = vmatprep.subr.mxu0 0.0
    %325 = vmatpush1.msra.mxu0 %v226
    %326 = vmatprep.subr.mxu0 0.0
    %327 = vmatpush1.msra.mxu0 %v225
    %328 = vmatprep.subr.mxu0 0.0
    %329 = vmatpush1.msra.mxu0 %v224
    %330 = vmatprep.subr.mxu0 0.0
    %331 = vmatpush1.msra.mxu0 %v223
    %332 = vmatprep.subr.mxu0 0.0
    %333 = vmatpush1.msra.mxu0 %v222
    %334 = vmatprep.subr.mxu0 0.0
    %335 = vmatpush1.msra.mxu0 %v221
    %336 = vmatprep.subr.mxu0 0.0
    %337 = vmatpush1.msra.mxu0 %v220
    %338 = vmatprep.subr.mxu0 0.0
    %339 = vmatpush1.msra.mxu0 %v219
    %340 = vmatprep.subr.mxu0 0.0
    %341 = vmatpush2.msra.mxu0 0.0
    %342 = vmatprep.subr.mxu0 0.0
    %343 = vmatpush2.msra.mxu0 0.0
    %344 = vmatprep.subr.mxu0 0.0
    %345 = vmatpush2.msra.mxu0 0.0
    %346 = vmatprep.subr.mxu0 0.0
    %347 = vmatpush2.msra.mxu0 0.0
    %348 = vmatprep.subr.mxu0 0.0
    %349 = vmatpush2.msra.mxu0 0.0
    %350 = vmatprep.subr.mxu0 0.0
    %351 = vmatpush2.msra.mxu0 0.0
    %352 = vmatprep.subr.mxu0 0.0
    %353 = vmatpush2.msra.mxu0 0.0
    %354 = vmatprep.subr.mxu0 0.0
    %355 = vmatpush2.msra.mxu0 0.0
    %356 = vmatprep.subr.mxu0 0.0
    %357 = vmatpush2.msra.mxu0 0.0
    %358 = vmatprep.subr.mxu0 0.0
    %359 = vmatpush2.msra.mxu0 0.0
    %360 = vmatprep.subr.mxu0 0.0
    %361 = vmatpush2.msra.mxu0 0.0
    %362 = vmatprep.subr.mxu0 0.0
    %363 = vmatpush2.msra.mxu0 0.0
    %364 = vmatprep.subr.mxu0 0.0
    %365 = vmatpush2.msra.mxu0 0.0
    %366 = vmatprep.subr.mxu0 0.0
    %367 = vmatpush2.msra.mxu0 0.0
    %368 = vmatprep.subr.mxu0 0.0
    %369 = vmatpush2.msra.mxu0 0.0
    %370 = vmatprep.subr.mxu0 0.0
    %371 = vmatpush2.msra.mxu0 0.0
    %372 = vmatprep.mubr.f32.mxu0 0.0
    %373 = vmatmul.mubr.f32.gmra.mxu0 %v285
    %v374 = vpop.f32.mrf.mxu0
    %v375 = vadd.f32 %v246, %v374
    %v376 = vpop.f32.mrf.mxu0
    %377 = vmatprep.mubr.f32.mxu0 0.0
    %378 = vmatmul.mubr.f32.gmra.mxu0 %v288
    %v379 = vpop.f32.mrf.mxu0
    %v380 = vadd.f32 %v251, %v379
    %v381 = vpop.f32.mrf.mxu0
    %382 = vmatprep.mubr.f32.mxu0 0.0
    %383 = vmatmul.mubr.f32.gmra.mxu0 %v291
    %v384 = vpop.f32.mrf.mxu0
    %v385 = vadd.f32 %v256, %v384
    %v386 = vpop.f32.mrf.mxu0
    %387 = vmatprep.mubr.f32.mxu0 0.0
    %388 = vmatmul.mubr.f32.gmra.mxu0 %v294
    %v389 = vpop.f32.mrf.mxu0
    %v390 = vadd.f32 %v261, %v389
    %v391 = vpop.f32.mrf.mxu0
    %392 = vmatprep.mubr.f32.mxu0 0.0
    %393 = vmatmul.mubr.f32.gmra.mxu0 %v297
    %v394 = vpop.f32.mrf.mxu0
    %v395 = vadd.f32 %v266, %v394
    %v396 = vpop.f32.mrf.mxu0
    %397 = vmatprep.mubr.f32.mxu0 0.0
    %398 = vmatmul.mubr.f32.gmra.mxu0 %v300
    %v399 = vpop.f32.mrf.mxu0
    %v400 = vadd.f32 %v271, %v399
    %v401 = vpop.f32.mrf.mxu0
    %402 = vmatprep.mubr.f32.mxu0 0.0
    %403 = vmatmul.mubr.f32.gmra.mxu0 %v303
    %v404 = vpop.f32.mrf.mxu0
    %v405 = vadd.f32 %v276, %v404
    %v406 = vpop.f32.mrf.mxu0
    %407 = vmatprep.mubr.f32.mxu0 0.0
    %408 = vmatmul.mubr.f32.gmra.mxu0 %v306
    %v409 = vpop.f32.mrf.mxu0
    %v410 = vadd.f32 %v281, %v409
    %v411 = vpop.f32.mrf.mxu0
    %412 = vdwg.mxu0
    %v413 = vmax.f32 %v375, 0.0
    %v414 = vmax.f32 %v380, 0.0
    %v415 = vmax.f32 %v385, 0.0
    %v416 = vmax.f32 %v390, 0.0
    %v417 = vmax.f32 %v395, 0.0
    %v418 = vmax.f32 %v400, 0.0
    %v419 = vmax.f32 %v405, 0.0
    %v420 = vmax.f32 %v410, 0.0
    %v421 = vld [vmem:[%s5] sm:$0x3f]
    %v422 = vld [vmem:[%s6] sm:$0x3f]
    %424 = vset.pattern.permute.xlu0 0
    %425 = vperm.xlu0 %424, %v422
    %v426 = vpop.permute.xlu0 %425
    %v429 = vsel %vm283, %v421, 0
    %431 = vmatprep.subr.mxu0 0.0
    %432 = vmatpush1.msra.mxu0 0.0
    %433 = vmatprep.subr.mxu0 0.0
    %434 = vmatpush1.msra.mxu0 0.0
    %435 = vmatprep.subr.mxu0 0.0
    %436 = vmatpush1.msra.mxu0 0.0
    %437 = vmatprep.subr.mxu0 0.0
    %438 = vmatpush1.msra.mxu0 0.0
    %439 = vmatprep.subr.mxu0 0.0
    %440 = vmatpush1.msra.mxu0 0.0
    %441 = vmatprep.subr.mxu0 0.0
    %442 = vmatpush1.msra.mxu0 0.0
    %443 = vmatprep.subr.mxu0 0.0
    %444 = vmatpush1.msra.mxu0 0.0
    %445 = vmatprep.subr.mxu0 0.0
    %446 = vmatpush1.msra.mxu0 0.0
    %447 = vmatprep.subr.mxu0 0.0
    %448 = vmatpush1.msra.mxu0 %v420
    %449 = vmatprep.subr.mxu0 0.0
    %450 = vmatpush1.msra.mxu0 %v419
    %451 = vmatprep.subr.mxu0 0.0
    %452 = vmatpush1.msra.mxu0 %v418
    %453 = vmatprep.subr.mxu0 0.0
    %454 = vmatpush1.msra.mxu0 %v417
    %455 = vmatprep.subr.mxu0 0.0
    %456 = vmatpush1.msra.mxu0 %v416
    %457 = vmatprep.subr.mxu0 0.0
    %458 = vmatpush1.msra.mxu0 %v415
    %459 = vmatprep.subr.mxu0 0.0
    %460 = vmatpush1.msra.mxu0 %v414
    %461 = vmatprep.subr.mxu0 0.0
    %462 = vmatpush1.msra.mxu0 %v413
    %463 = vmatprep.subr.mxu0 0.0
    %464 = vmatpush2.msra.mxu0 0.0
    %465 = vmatprep.subr.mxu0 0.0
    %466 = vmatpush2.msra.mxu0 0.0
    %467 = vmatprep.subr.mxu0 0.0
    %468 = vmatpush2.msra.mxu0 0.0
    %469 = vmatprep.subr.mxu0 0.0
    %470 = vmatpush2.msra.mxu0 0.0
    %471 = vmatprep.subr.mxu0 0.0
    %472 = vmatpush2.msra.mxu0 0.0
    %473 = vmatprep.subr.mxu0 0.0
    %474 = vmatpush2.msra.mxu0 0.0
    %475 = vmatprep.subr.mxu0 0.0
    %476 = vmatpush2.msra.mxu0 0.0
    %477 = vmatprep.subr.mxu0 0.0
    %478 = vmatpush2.msra.mxu0 0.0
    %479 = vmatprep.subr.mxu0 0.0
    %480 = vmatpush2.msra.mxu0 0.0
    %481 = vmatprep.subr.mxu0 0.0
    %482 = vmatpush2.msra.mxu0 0.0
    %483 = vmatprep.subr.mxu0 0.0
    %484 = vmatpush2.msra.mxu0 0.0
    %485 = vmatprep.subr.mxu0 0.0
    %486 = vmatpush2.msra.mxu0 0.0
    %487 = vmatprep.subr.mxu0 0.0
    %488 = vmatpush2.msra.mxu0 0.0
    %489 = vmatprep.subr.mxu0 0.0
    %490 = vmatpush2.msra.mxu0 0.0
    %491 = vmatprep.subr.mxu0 0.0
    %492 = vmatpush2.msra.mxu0 0.0
    %493 = vmatprep.subr.mxu0 0.0
    %494 = vmatpush2.msra.mxu0 0.0
    %495 = vmatprep.mubr.f32.mxu0 0.0
    %496 = vmatmul.mubr.f32.gmra.mxu0 %v429
    %v497 = vpop.f32.mrf.mxu0
    %v498 = vadd.f32 %v426, %v497
    %v499 = vpop.f32.mrf.mxu0
    %500 = vdwg.mxu0
    %vm501 = vcmask 62464
    %502 = vst.msk [vmem:[#allocation2] sm:$0x3f] %vm501, %v498
    // Predicated region
    $region30: #{tpu_custom_call.1} parent=1 // pred_check
      _
    $region31: #{tpu_custom_call.1} parent=1 // pred_check_branch
      %504 = sbr.rel (0) target = $region33
    $region32: #{tpu_custom_call.1} parent=1 // pred_region
      %s506 = ssub.s32 128, 128
      %507 = vsyncadd [#allocation3], %s506
      %s509 = sshll.u32 [#allocation2], 4
      %s510 = int_to_ptr.vmem [resolvable:$true] %s509
      %512 = dma.vmem_to_hbm [thread:$0]  %s510, 128, %s7, [#allocation3]
    $region33: #{tpu_custom_call.1} parent=1 // pred_fallthru
      _
    // Predicated region
    $region34: #{tpu_custom_call.1} parent=1 // pred_check
      _
    $region35: #{tpu_custom_call.1} parent=1 // pred_check_branch
      %514 = sbr.rel (0) target = $region37
    $region36: #{tpu_custom_call.1} parent=1 // pred_region
      %515 = dma.done [#allocation3], 128
    $region37: #{tpu_custom_call.1} parent=1 // pred_fallthru
      _
    %516 = vsyncpa [#allocation3], 1

</llo_original>
